<compile_context>
chip_gen: v5e
topology: v5e:2x2
jax: 0.10.0
libtpu: 0.0.40
codegen_flags: <defaults>
</compile_context>

<pallas_src>
import jax
import jax.numpy as jnp
from jax.experimental import pallas as pl
from jax.experimental.pallas import tpu as pltpu

IN_FEATURES = 3
OUT_FEATURES = 4
SUBLANE = 8
MAX_BATCH_TILE = 4096   # rows per grid step; ~8 MiB double-buffered VMEM total


def _linear_residual_kernel(x_ref, w_ref, b_ref, o_ref):
    # x_ref : (TB, 3)  raw input rows
    # w_ref : (3, 4)   effective weight = W^T + eye(3, 4)  (residual folded in)
    # b_ref : (1, 4)   bias
    # o_ref : (TB, 4)  output rows = x @ W^T + b + zero-padded x
    x = x_ref[...]
    w = w_ref[...]
    # (TB, 1) * (1, 4) lane/sublane broadcasts -> (TB, 4); 3 FMAs total.
    acc = b_ref[...] + x[:, 0:1] * w[0:1, :]
    for k in range(1, IN_FEATURES):
        acc = acc + x[:, k:k + 1] * w[k:k + 1, :]
    o_ref[...] = acc


def model_forward(x, weight, bias):
    """x: (B, 3) f32; weight: (4, 3) f32; bias: (4,) f32 -> (B, 4) f32."""
    B = x.shape[0]
    # Batch tile: multiple of 8 sublanes, capped so double-buffered in+out
    # blocks stay well under the scoped VMEM limit on every TPU generation
    # (v7x included).  Partial last blocks are handled by Pallas (masked
    # stores; out-of-bounds rows never feed in-bounds results).
    TB = min(MAX_BATCH_TILE, ((B + SUBLANE - 1) // SUBLANE) * SUBLANE)
    grid = (pl.cdiv(B, TB),)

    # Tiny parameter-side prep (48 / 16 bytes; negligible vs. the batch data):
    # fold the zero-padded residual into the weight and make the bias 2-D.
    w_eff = weight.T.astype(jnp.float32) + jnp.eye(
        IN_FEATURES, OUT_FEATURES, dtype=jnp.float32
    )
    b2 = bias.reshape(1, OUT_FEATURES).astype(jnp.float32)

    return pl.pallas_call(
        _linear_residual_kernel,
        out_shape=jax.ShapeDtypeStruct((B, OUT_FEATURES), jnp.float32),
        grid=grid,
        in_specs=[
            pl.BlockSpec((TB, IN_FEATURES), lambda i: (i, 0)),
            pl.BlockSpec((IN_FEATURES, OUT_FEATURES), lambda i: (0, 0)),
            pl.BlockSpec((1, OUT_FEATURES), lambda i: (0, 0)),
        ],
        out_specs=pl.BlockSpec((TB, OUT_FEATURES), lambda i: (i, 0)),
        compiler_params=pltpu.CompilerParams(
            dimension_semantics=("parallel",)
        ),
    )(x.astype(jnp.float32), w_eff, b2)


if __name__ == "__main__":
    key = jax.random.PRNGKey(0)
    k_x, k_w, k_b = jax.random.split(key, 3)

    # Deterministic parameter init (matches PyTorch Linear's U(-1/sqrt(fan_in), ...)).
    bound = 1.0 / (IN_FEATURES ** 0.5)
    weight = jax.random.uniform(
        k_w, (OUT_FEATURES, IN_FEATURES), jnp.float32, -bound, bound
    )
    bias = jax.random.uniform(k_b, (OUT_FEATURES,), jnp.float32, -bound, bound)

    # Small input consistent with Linear(3, 4): batch=8, features=3.
    x = jax.random.normal(k_x, (8, IN_FEATURES), jnp.float32)

    out = jax.block_until_ready(model_forward(x, weight, bias))

    # Pure-JAX reference: linear + zero-padded residual add.
    v1 = x @ weight.T + bias
    x_res = jnp.pad(x, ((0, 0), (0, OUT_FEATURES - IN_FEATURES)))
    ref = v1 + x_res
    assert out.shape == (8, OUT_FEATURES)
    assert jnp.allclose(out, ref, atol=1e-5, rtol=1e-5)

    print("KERNEL_OK")
</pallas_src>

<mosaic_0001>
module attributes {stable_mosaic.version = 11 : i64} {
  func.func @_linear_residual_kernel(%arg0: i32, %arg1: memref<8x3xf32, #tpu.memory_space<vmem>>, %arg2: memref<3x4xf32, #tpu.memory_space<vmem>>, %arg3: memref<1x4xf32, #tpu.memory_space<vmem>>, %arg4: memref<8x4xf32, #tpu.memory_space<vmem>>) attributes {dimension_semantics = [#tpu.dimension_semantics<parallel>], iteration_bounds = array<i64: 1>, scalar_prefetch = 0 : i64, scratch_operands = 0 : i64, tpu.core_type = #tpu.core_type<tc>, window_params = [{transform_indices = @transform_0, window_bounds = array<i64: 8, 3>}, {pipeline_mode = #tpu.pipeline_mode<synchronous>, transform_indices = @transform_1, window_bounds = array<i64: 3, 4>}, {pipeline_mode = #tpu.pipeline_mode<synchronous>, transform_indices = @transform_2, window_bounds = array<i64: 1, 4>}, {transform_indices = @transform_3, window_bounds = array<i64: 8, 4>}]} {
    %c0 = arith.constant 0 : index
    %c0_0 = arith.constant 0 : index
    %0 = vector.load %arg1[%c0, %c0_0] : memref<8x3xf32, #tpu.memory_space<vmem>>, vector<8x3xf32>
    %c0_1 = arith.constant 0 : index
    %c0_2 = arith.constant 0 : index
    %1 = vector.load %arg2[%c0_1, %c0_2] : memref<3x4xf32, #tpu.memory_space<vmem>>, vector<3x4xf32>
    %c0_3 = arith.constant 0 : index
    %c0_4 = arith.constant 0 : index
    %2 = vector.load %arg3[%c0_3, %c0_4] : memref<1x4xf32, #tpu.memory_space<vmem>>, vector<1x4xf32>
    %3 = vector.extract_strided_slice %0 {offsets = [0, 0], sizes = [8, 1], strides = [1, 1]} : vector<8x3xf32> to vector<8x1xf32>
    %4 = vector.extract_strided_slice %1 {offsets = [0, 0], sizes = [1, 4], strides = [1, 1]} : vector<3x4xf32> to vector<1x4xf32>
    %5 = vector.broadcast %3 : vector<8x1xf32> to vector<8x4xf32>
    %6 = vector.broadcast %4 : vector<1x4xf32> to vector<8x4xf32>
    %7 = arith.mulf %5, %6 : vector<8x4xf32>
    %8 = vector.broadcast %2 : vector<1x4xf32> to vector<8x4xf32>
    %9 = arith.addf %8, %7 : vector<8x4xf32>
    %10 = vector.extract_strided_slice %0 {offsets = [0, 1], sizes = [8, 1], strides = [1, 1]} : vector<8x3xf32> to vector<8x1xf32>
    %11 = vector.extract_strided_slice %1 {offsets = [1, 0], sizes = [1, 4], strides = [1, 1]} : vector<3x4xf32> to vector<1x4xf32>
    %12 = vector.broadcast %10 : vector<8x1xf32> to vector<8x4xf32>
    %13 = vector.broadcast %11 : vector<1x4xf32> to vector<8x4xf32>
    %14 = arith.mulf %12, %13 : vector<8x4xf32>
    %15 = arith.addf %9, %14 : vector<8x4xf32>
    %16 = vector.extract_strided_slice %0 {offsets = [0, 2], sizes = [8, 1], strides = [1, 1]} : vector<8x3xf32> to vector<8x1xf32>
    %17 = vector.extract_strided_slice %1 {offsets = [2, 0], sizes = [1, 4], strides = [1, 1]} : vector<3x4xf32> to vector<1x4xf32>
    %18 = vector.broadcast %16 : vector<8x1xf32> to vector<8x4xf32>
    %19 = vector.broadcast %17 : vector<1x4xf32> to vector<8x4xf32>
    %20 = arith.mulf %18, %19 : vector<8x4xf32>
    %21 = arith.addf %15, %20 : vector<8x4xf32>
    %c0_5 = arith.constant 0 : index
    %c0_6 = arith.constant 0 : index
    %22 = vector.load %arg4[%c0_5, %c0_6] : memref<8x4xf32, #tpu.memory_space<vmem>>, vector<8x4xf32>
    tpu.vector_store %arg4[%c0_5, %c0_6], %21 {strides = array<i32>} : memref<8x4xf32, #tpu.memory_space<vmem>>, vector<8x4xf32>,
    return
  }
  func.func @transform_0(%arg0: i32) -> (i32, i32) {
    %c0_i32 = arith.constant 0 : i32
    %c0_i32_0 = arith.constant 0 : i32
    return %arg0, %c0_i32 : i32, i32
  }
  func.func @transform_1(%arg0: i32) -> (i32, i32) {
    %c0_i32 = arith.constant 0 : i32
    %c0_i32_0 = arith.constant 0 : i32
    %c0_i32_1 = arith.constant 0 : i32
    return %c0_i32, %c0_i32_0 : i32, i32
  }
  func.func @transform_2(%arg0: i32) -> (i32, i32) {
    %c0_i32 = arith.constant 0 : i32
    %c0_i32_0 = arith.constant 0 : i32
    %c0_i32_1 = arith.constant 0 : i32
    return %c0_i32, %c0_i32_0 : i32, i32
  }
  func.func @transform_3(%arg0: i32) -> (i32, i32) {
    %c0_i32 = arith.constant 0 : i32
    %c0_i32_0 = arith.constant 0 : i32
    return %arg0, %c0_i32 : i32, i32
  }
}

</mosaic_0001>

<llo_original>
// kernel: tpu_custom_call.1
$region0: #{tpu_custom_call.1}
  #allocation0 [shape = 'u32[]', space=smem, size = 0x4, offset = 0x4, fixed_abs, tag = 'smem constant byte address 0x4 - core index']
  #allocation1 [shape = 'u32[72,128]{1,0:T(1,128)}', space=vmem, size = 0x9000, scoped, tag = 'internal scratch']
  %s0 = inlined_call_operand.vmem [shape: f32[8,3], index: 0, kind: input, shape index: {}]
  %s1 = inlined_call_operand.vmem [shape: f32[3,4], index: 1, kind: input, shape index: {}]
  %s2 = inlined_call_operand.vmem [shape: f32[1,4], index: 2, kind: input, shape index: {}]
  %s3 = inlined_call_operand.vmem [shape: f32[8,4], index: 3, kind: output, shape index: {}]
  %s4 = sld [smem:[#allocation0]]
  $region22: #{tpu_custom_call.1} parent=0
    _
  %s6 = ssub.s32 1, %s4
  %s7 = scalar_select 0, %s6, %s4
  // Predicated region
  $region2: #{tpu_custom_call.1} parent=0 // pred_check
    _
  $region3: #{tpu_custom_call.1} parent=0 // pred_check_branch
    %9 = sbr.rel (0) target = $region5
  $region4: #{tpu_custom_call.1} parent=0 // pred_region
    _
  $region5: #{tpu_custom_call.1} parent=0 // pred_fallthru
    _
  // Predicated region
  $region6: #{tpu_custom_call.1} parent=0 // pred_check
    _
  $region7: #{tpu_custom_call.1} parent=0 // pred_check_branch
    %11 = sbr.rel (0) target = $region9
  $region8: #{tpu_custom_call.1} parent=0 // pred_region
    _
  $region9: #{tpu_custom_call.1} parent=0 // pred_fallthru
    _
  // Predicated region
  $region10: #{tpu_custom_call.1} parent=0 // pred_check
    _
  $region11: #{tpu_custom_call.1} parent=0 // pred_check_branch
    %13 = sbr.rel (0) target = $region13
  $region12: #{tpu_custom_call.1} parent=0 // pred_region
    _
  $region13: #{tpu_custom_call.1} parent=0 // pred_fallthru
    _
  %v14 = vld [vmem:[%s0] sm:$0xff]
  %v15 = vld [vmem:[%s1] sm:$0x7]
  %v16 = vld [vmem:[%s2] sm:$0x1]
  %18 = vset.pattern.permute.xlu0 0
  %19 = vperm.xlu0 %18, %v14
  %v20 = vpop.permute.xlu0 %19
  %v22 = vperm.slane %v15, 0
  %v23 = vmul.f32 %v20, %v22
  %v25 = vperm.slane %v16, 0
  %v27 = vadd.f32 %v25, %v23
  %28 = vset.pattern.permute.xlu0 1
  %29 = vperm.xlu0 %28, %v14
  %v30 = vpop.permute.xlu0 %29
  %v32 = vperm.slane %v15, 1
  %v33 = vmul.f32 %v30, %v32
  %v34 = vadd.f32 %v27, %v33
  %35 = vset.pattern.permute.xlu0 2
  %36 = vperm.xlu0 %35, %v14
  %v37 = vpop.permute.xlu0 %36
  %v39 = vperm.slane %v15, 2
  %v40 = vmul.f32 %v37, %v39
  %v41 = vadd.f32 %v34, %v40
  %vm42 = vcmask 31744
  %43 = vst.msk [vmem:[%s3] sm:$0xff] %vm42, %v41
  // Predicated region
  $region14: #{tpu_custom_call.1} parent=0 // pred_check
    _
  $region15: #{tpu_custom_call.1} parent=0 // pred_check_branch
    %45 = sbr.rel (0) target = $region17
  $region16: #{tpu_custom_call.1} parent=0 // pred_region
    _
  $region17: #{tpu_custom_call.1} parent=0 // pred_fallthru
    _
  // Predicated region
  $region18: #{tpu_custom_call.1} parent=0 // pred_check
    _
  $region19: #{tpu_custom_call.1} parent=0 // pred_check_branch
    %47 = sbr.rel (0) target = $region21
  $region20: #{tpu_custom_call.1} parent=0 // pred_region
    _
  $region21: #{tpu_custom_call.1} parent=0 // pred_fallthru
    _

</llo_original>
